<compile_context>
chip_gen: v5e
topology: v5e:2x2
jax: 0.10.0
libtpu: 0.0.40
codegen_flags: <defaults>
</compile_context>

<pallas_src>
import functools

import jax
import jax.numpy as jnp
from jax.experimental import pallas as pl
from jax.experimental.pallas import tpu as pltpu

NUM_CLASSES = 3


def _myloss_kernel(logits_ref, labels_ref, weights_ref, out_ref,
                   acc_ce_ref, acc_w_ref, *, tile_n, n_total):
    i = pl.program_id(0)

    @pl.when(i == 0)
    def _init():
        acc_ce_ref[...] = jnp.zeros_like(acc_ce_ref)
        acc_w_ref[...] = jnp.zeros_like(acc_w_ref)

    # (3, T): classes on sublanes, samples on lanes.  Cast to f32 in-kernel.
    x = logits_ref[...].astype(jnp.float32)
    lab = labels_ref[...]                       # (1, T) int32

    x0 = x[0:1, :]                              # (1, T)
    x1 = x[1:2, :]
    x2 = x[2:3, :]

    # Numerically stable log-sum-exp over the 3 class rows (per-lane only).
    m = jnp.maximum(jnp.maximum(x0, x1), x2)
    e = jnp.exp(x0 - m) + jnp.exp(x1 - m) + jnp.exp(x2 - m)
    lse = jnp.log(e)

    is0 = lab == 0
    is1 = lab == 1

    picked = jnp.where(is0, x0, jnp.where(is1, x1, x2))     # logit at label
    ce = lse + m - picked                                   # (1, T)

    # Per-class weights as SMEM scalars, selected per sample.
    w0 = weights_ref[0]
    w1 = weights_ref[1]
    w2 = weights_ref[2]
    w = jnp.where(is0, w0, jnp.where(is1, w1, w2))          # (1, T) f32

    # Mask out padded lanes of the last tile (global index >= n_total).
    col = jax.lax.broadcasted_iota(jnp.int32, (1, tile_n), 1)
    valid = (i * tile_n + col) < n_total
    ce = jnp.where(valid, ce, 0.0)
    w = jnp.where(valid, w, 0.0)

    # One lane-reduction (XLU) per tile, added into the scalar accumulators.
    acc_ce_ref[...] += jnp.sum(ce, axis=1, keepdims=True)
    acc_w_ref[...] += jnp.sum(w, axis=1, keepdims=True)

    @pl.when(i == pl.num_programs(0) - 1)
    def _finalize():
        inv_n = jnp.float32(1.0 / n_total)      # TOTAL N, not tile size
        uw = acc_ce_ref[...] * inv_n            # mean cross entropy  (1, 1)
        mean_w = acc_w_ref[...] * inv_n         # mean sample weight  (1, 1)
        out_ref[...] = (mean_w * uw).astype(jnp.float32)


def myloss(logits, labels, weights, *, tile_n=32768):
    """logits: (N, C) float, labels: (N,) int, weights: (C,) float -> scalar f32."""
    logits = jnp.asarray(logits)
    n, c = logits.shape
    assert c == NUM_CLASSES

    # Lane-major layout: one wrapper transpose puts N on the 128-lane axis.
    x = jnp.transpose(logits, (1, 0))                            # (3, N), keep dtype
    lab = jnp.asarray(labels).astype(jnp.int32).reshape(1, n)    # (1, N)
    w = jnp.asarray(weights, dtype=jnp.float32).reshape(NUM_CLASSES)

    # Lane-dense tile: multiple of 128, capped by N, fits VMEM on v5e/v6e/v7x.
    tile = max(128, min(int(tile_n), pl.cdiv(n, 128) * 128))
    n_blocks = pl.cdiv(n, tile)
    n_pad = n_blocks * tile
    if n_pad != n:
        x = jnp.pad(x, ((0, 0), (0, n_pad - n)))
        lab = jnp.pad(lab, ((0, 0), (0, n_pad - n)))

    kernel = functools.partial(_myloss_kernel, tile_n=tile, n_total=n)

    out = pl.pallas_call(
        kernel,
        out_shape=jax.ShapeDtypeStruct((1, 1), jnp.float32),
        grid=(n_blocks,),
        in_specs=[
            pl.BlockSpec((NUM_CLASSES, tile), lambda i: (0, i)),   # logits (3, T)
            pl.BlockSpec((1, tile), lambda i: (0, i)),             # labels (1, T)
            pl.BlockSpec(memory_space=pltpu.MemorySpace.SMEM),     # class weights (3,)
        ],
        out_specs=pl.BlockSpec((1, 1), lambda i: (0, 0)),
        scratch_shapes=[
            pltpu.VMEM((1, 1), jnp.float32),   # running sum(ce)
            pltpu.VMEM((1, 1), jnp.float32),   # running sum(w)
        ],
        compiler_params=pltpu.CompilerParams(
            dimension_semantics=("arbitrary",),   # carried accumulators across grid
        ),
    )(x, lab, w)
    return out[0, 0]


def _reference(logits, labels, weights):
    # Plain-JAX reference mirroring the PyTorch forward.
    onehot = jax.nn.one_hot(labels, NUM_CLASSES, dtype=jnp.float32)
    w = jnp.sum(jnp.asarray(weights, jnp.float32)[None, :] * onehot, axis=1)
    logp = jax.nn.log_softmax(logits.astype(jnp.float32), axis=-1)
    uw = jnp.mean(-jnp.sum(logp * onehot, axis=1))
    return jnp.mean(w * uw)


if __name__ == "__main__":
    key = jax.random.PRNGKey(0)
    k1, k2, k3, k4 = jax.random.split(key, 4)

    weights = jnp.array([0.5, 1.0, 2.0], dtype=jnp.float32)

    # Small shape consistent with the module: batch of 8 samples, 3 classes.
    n_small = 8
    logits_s = jax.random.normal(k1, (n_small, NUM_CLASSES), dtype=jnp.float32)
    labels_s = jax.random.randint(k2, (n_small,), 0, NUM_CLASSES, dtype=jnp.int32)

    loss_s = myloss(logits_s, labels_s, weights)
    jax.block_until_ready(loss_s)
    ref_s = _reference(logits_s, labels_s, weights)
    assert jnp.allclose(loss_s, ref_s, rtol=1e-5, atol=1e-5), (loss_s, ref_s)

    # Multi-tile path: several grid steps plus a remainder-masked last tile.
    n_big = 1000
    logits_b = jax.random.normal(k3, (n_big, NUM_CLASSES), dtype=jnp.float32)
    labels_b = jax.random.randint(k4, (n_big,), 0, NUM_CLASSES, dtype=jnp.int32)

    loss_b = myloss(logits_b, labels_b, weights, tile_n=128)
    jax.block_until_ready(loss_b)
    ref_b = _reference(logits_b, labels_b, weights)
    assert jnp.allclose(loss_b, ref_b, rtol=1e-5, atol=1e-5), (loss_b, ref_b)

    print("KERNEL_OK")
</pallas_src>

<mosaic_0001>
module attributes {stable_mosaic.version = 11 : i64} {
  func.func @_myloss_kernel(%arg0: i32, %arg1: memref<3x128xf32, #tpu.memory_space<vmem>>, %arg2: memref<1x128xi32, #tpu.memory_space<vmem>>, %arg3: memref<3xf32, #tpu.memory_space<smem>>, %arg4: memref<1x1xf32, #tpu.memory_space<vmem>>, %arg5: memref<1x1xf32, #tpu.memory_space<vmem>>, %arg6: memref<1x1xf32, #tpu.memory_space<vmem>>) attributes {dimension_semantics = [#tpu.dimension_semantics<arbitrary>], iteration_bounds = array<i64: 1>, scalar_prefetch = 0 : i64, scratch_operands = 2 : i64, tpu.core_type = #tpu.core_type<tc>, window_params = [{transform_indices = @transform_0, window_bounds = array<i64: 3, 128>}, {transform_indices = @transform_1, window_bounds = array<i64: 1, 128>}, {transform_indices = @transform_2, window_bounds = array<i64: 3>}, {pipeline_mode = #tpu.pipeline_mode<synchronous>, transform_indices = @transform_3, window_bounds = array<i64: 1, 1>}]} {
    %c0_i32 = arith.constant 0 : i32
    %0 = arith.cmpi eq, %arg0, %c0_i32 : i32
    %1 = arith.extui %0 : i1 to i32
    %c0_i32_0 = arith.constant 0 : i32
    %2 = arith.cmpi ne, %1, %c0_i32_0 : i32
    scf.if %2 {
      %cst_19 = arith.constant 0.000000e+00 : f32
      %58 = vector.broadcast %cst_19 : f32 to vector<1x1xf32>
      %c0_20 = arith.constant 0 : index
      %c0_21 = arith.constant 0 : index
      %59 = vector.load %arg5[%c0_20, %c0_21] : memref<1x1xf32, #tpu.memory_space<vmem>>, vector<1x1xf32>
      tpu.vector_store %arg5[%c0_20, %c0_21], %58 {strides = array<i32>} : memref<1x1xf32, #tpu.memory_space<vmem>>, vector<1x1xf32>,
      %cst_22 = arith.constant 0.000000e+00 : f32
      %60 = vector.broadcast %cst_22 : f32 to vector<1x1xf32>
      %c0_23 = arith.constant 0 : index
      %c0_24 = arith.constant 0 : index
      %61 = vector.load %arg6[%c0_23, %c0_24] : memref<1x1xf32, #tpu.memory_space<vmem>>, vector<1x1xf32>
      tpu.vector_store %arg6[%c0_23, %c0_24], %60 {strides = array<i32>} : memref<1x1xf32, #tpu.memory_space<vmem>>, vector<1x1xf32>,
    } else {
    }
    %c0 = arith.constant 0 : index
    %c0_1 = arith.constant 0 : index
    %3 = vector.load %arg1[%c0, %c0_1] : memref<3x128xf32, #tpu.memory_space<vmem>>, vector<3x128xf32>
    %c0_2 = arith.constant 0 : index
    %c0_3 = arith.constant 0 : index
    %4 = vector.load %arg2[%c0_2, %c0_3] : memref<1x128xi32, #tpu.memory_space<vmem>>, vector<1x128xi32>
    %5 = vector.extract_strided_slice %3 {offsets = [0, 0], sizes = [1, 128], strides = [1, 1]} : vector<3x128xf32> to vector<1x128xf32>
    %6 = vector.extract_strided_slice %3 {offsets = [1, 0], sizes = [1, 128], strides = [1, 1]} : vector<3x128xf32> to vector<1x128xf32>
    %7 = vector.extract_strided_slice %3 {offsets = [2, 0], sizes = [1, 128], strides = [1, 1]} : vector<3x128xf32> to vector<1x128xf32>
    %8 = arith.maximumf %5, %6 : vector<1x128xf32>
    %9 = arith.maximumf %8, %7 : vector<1x128xf32>
    %10 = arith.subf %5, %9 : vector<1x128xf32>
    %11 = math.exp %10 : vector<1x128xf32>
    %12 = arith.subf %6, %9 : vector<1x128xf32>
    %13 = math.exp %12 : vector<1x128xf32>
    %14 = arith.addf %11, %13 : vector<1x128xf32>
    %15 = arith.subf %7, %9 : vector<1x128xf32>
    %16 = math.exp %15 : vector<1x128xf32>
    %17 = arith.addf %14, %16 : vector<1x128xf32>
    %18 = math.log %17 : vector<1x128xf32>
    %c0_i32_4 = arith.constant 0 : i32
    %19 = vector.broadcast %c0_i32_4 : i32 to vector<1x128xi32>
    %20 = arith.cmpi eq, %4, %19 : vector<1x128xi32>
    %c1_i32 = arith.constant 1 : i32
    %21 = vector.broadcast %c1_i32 : i32 to vector<1x128xi32>
    %22 = arith.cmpi eq, %4, %21 : vector<1x128xi32>
    %23 = arith.select %22, %6, %7 : vector<1x128xi1>, vector<1x128xf32>
    %24 = arith.select %20, %5, %23 : vector<1x128xi1>, vector<1x128xf32>
    %25 = arith.addf %18, %9 : vector<1x128xf32>
    %26 = arith.subf %25, %24 : vector<1x128xf32>
    %c0_5 = arith.constant 0 : index
    %27 = memref.load %arg3[%c0_5] : memref<3xf32, #tpu.memory_space<smem>>
    %c1 = arith.constant 1 : index
    %28 = memref.load %arg3[%c1] : memref<3xf32, #tpu.memory_space<smem>>
    %c2 = arith.constant 2 : index
    %29 = memref.load %arg3[%c2] : memref<3xf32, #tpu.memory_space<smem>>
    %30 = vector.broadcast %28 : f32 to vector<1x128xf32>
    %31 = vector.broadcast %29 : f32 to vector<1x128xf32>
    %32 = arith.select %22, %30, %31 : vector<1x128xi1>, vector<1x128xf32>
    %33 = vector.broadcast %27 : f32 to vector<1x128xf32>
    %34 = arith.select %20, %33, %32 : vector<1x128xi1>, vector<1x128xf32>
    %35 = tpu.iota {dimensions = array<i32: 1>} : vector<1x128xi32>
    %c128_i32 = arith.constant 128 : i32
    %36 = arith.muli %arg0, %c128_i32 : i32
    %37 = vector.broadcast %36 : i32 to vector<1x128xi32>
    %38 = arith.addi %37, %35 : vector<1x128xi32>
    %c8_i32 = arith.constant 8 : i32
    %39 = vector.broadcast %c8_i32 : i32 to vector<1x128xi32>
    %40 = arith.cmpi slt, %38, %39 : vector<1x128xi32>
    %cst = arith.constant 0.000000e+00 : f32
    %41 = vector.broadcast %cst : f32 to vector<1x128xf32>
    %42 = arith.select %40, %26, %41 : vector<1x128xi1>, vector<1x128xf32>
    %cst_6 = arith.constant 0.000000e+00 : f32
    %43 = vector.broadcast %cst_6 : f32 to vector<1x128xf32>
    %44 = arith.select %40, %34, %43 : vector<1x128xi1>, vector<1x128xf32>
    %c0_7 = arith.constant 0 : index
    %c0_8 = arith.constant 0 : index
    %45 = vector.load %arg5[%c0_7, %c0_8] : memref<1x1xf32, #tpu.memory_space<vmem>>, vector<1x1xf32>
    %cst_9 = arith.constant dense<0.000000e+00> : vector<1xf32>
    %46 = vector.multi_reduction <add>, %42, %cst_9 [1] : vector<1x128xf32> to vector<1xf32>
    %47 = vector.shape_cast %46 : vector<1xf32> to vector<1x1xf32>
    %48 = arith.addf %45, %47 : vector<1x1xf32>
    %c0_10 = arith.constant 0 : index
    %c0_11 = arith.constant 0 : index
    %49 = vector.load %arg5[%c0_10, %c0_11] : memref<1x1xf32, #tpu.memory_space<vmem>>, vector<1x1xf32>
    tpu.vector_store %arg5[%c0_10, %c0_11], %48 {strides = array<i32>} : memref<1x1xf32, #tpu.memory_space<vmem>>, vector<1x1xf32>,
    %c0_12 = arith.constant 0 : index
    %c0_13 = arith.constant 0 : index
    %50 = vector.load %arg6[%c0_12, %c0_13] : memref<1x1xf32, #tpu.memory_space<vmem>>, vector<1x1xf32>
    %cst_14 = arith.constant dense<0.000000e+00> : vector<1xf32>
    %51 = vector.multi_reduction <add>, %44, %cst_14 [1] : vector<1x128xf32> to vector<1xf32>
    %52 = vector.shape_cast %51 : vector<1xf32> to vector<1x1xf32>
    %53 = arith.addf %50, %52 : vector<1x1xf32>
    %c0_15 = arith.constant 0 : index
    %c0_16 = arith.constant 0 : index
    %54 = vector.load %arg6[%c0_15, %c0_16] : memref<1x1xf32, #tpu.memory_space<vmem>>, vector<1x1xf32>
    tpu.vector_store %arg6[%c0_15, %c0_16], %53 {strides = array<i32>} : memref<1x1xf32, #tpu.memory_space<vmem>>, vector<1x1xf32>,
    %c0_i32_17 = arith.constant 0 : i32
    %55 = arith.cmpi eq, %arg0, %c0_i32_17 : i32
    %56 = arith.extui %55 : i1 to i32
    %c0_i32_18 = arith.constant 0 : i32
    %57 = arith.cmpi ne, %56, %c0_i32_18 : i32
    scf.if %57 {
      %c0_19 = arith.constant 0 : index
      %c0_20 = arith.constant 0 : index
      %58 = vector.load %arg5[%c0_19, %c0_20] : memref<1x1xf32, #tpu.memory_space<vmem>>, vector<1x1xf32>
      %cst_21 = arith.constant 1.250000e-01 : f32
      %59 = vector.broadcast %cst_21 : f32 to vector<1x1xf32>
      %60 = arith.mulf %58, %59 : vector<1x1xf32>
      %c0_22 = arith.constant 0 : index
      %c0_23 = arith.constant 0 : index
      %61 = vector.load %arg6[%c0_22, %c0_23] : memref<1x1xf32, #tpu.memory_space<vmem>>, vector<1x1xf32>
      %cst_24 = arith.constant 1.250000e-01 : f32
      %62 = vector.broadcast %cst_24 : f32 to vector<1x1xf32>
      %63 = arith.mulf %61, %62 : vector<1x1xf32>
      %64 = arith.mulf %63, %60 : vector<1x1xf32>
      %c0_25 = arith.constant 0 : index
      %c0_26 = arith.constant 0 : index
      %65 = vector.load %arg4[%c0_25, %c0_26] : memref<1x1xf32, #tpu.memory_space<vmem>>, vector<1x1xf32>
      tpu.vector_store %arg4[%c0_25, %c0_26], %64 {strides = array<i32>} : memref<1x1xf32, #tpu.memory_space<vmem>>, vector<1x1xf32>,
    } else {
    }
    return
  }
  func.func @transform_0(%arg0: i32) -> (i32, i32) {
    %c0_i32 = arith.constant 0 : i32
    %c0_i32_0 = arith.constant 0 : i32
    return %c0_i32, %arg0 : i32, i32
  }
  func.func @transform_1(%arg0: i32) -> (i32, i32) {
    %c0_i32 = arith.constant 0 : i32
    %c0_i32_0 = arith.constant 0 : i32
    return %c0_i32, %arg0 : i32, i32
  }
  func.func @transform_2(%arg0: i32) -> i32 {
    %c0_i32 = arith.constant 0 : i32
    %c0_i32_0 = arith.constant 0 : i32
    return %c0_i32 : i32
  }
  func.func @transform_3(%arg0: i32) -> (i32, i32) {
    %c0_i32 = arith.constant 0 : i32
    %c0_i32_0 = arith.constant 0 : i32
    %c0_i32_1 = arith.constant 0 : i32
    return %c0_i32, %c0_i32_0 : i32, i32
  }
}

</mosaic_0001>

<llo_original>
// kernel: tpu_custom_call.1
$region0: #{tpu_custom_call.1}
  #allocation0 [shape = 'u32[]', space=smem, size = 0x4, offset = 0x4, fixed_abs, tag = 'smem constant byte address 0x4 - core index']
  #allocation1 [shape = 'u32[72,128]{1,0:T(1,128)}', space=vmem, size = 0x9000, scoped, tag = 'internal scratch']
  #allocation2 [shape = 'f32[1,1]{1,0:T(1,128)}', space=vmem, size = 0x200, scoped, tag = 'scratch operand']
  #allocation3 [shape = 'f32[1,1]{1,0:T(1,128)}', space=vmem, size = 0x200, scoped, tag = 'scratch operand']
  %s0 = inlined_call_operand.hbm [shape: f32[3,128], index: 0, kind: input, shape index: {}]
  %s1 = inlined_call_operand.hbm [shape: s32[1,128], index: 1, kind: input, shape index: {}]
  %s2 = inlined_call_operand.vmem [shape: f32[3], index: 2, kind: input, shape index: {}]
  %s3 = inlined_call_operand.hbm [shape: f32[1,1], index: 3, kind: output, shape index: {}]
  %s4 = sld [smem:[#allocation0]]
  $region42: #{tpu_custom_call.1} parent=0
    _
  %s6 = ssub.s32 1, %s4
  %s7 = scalar_select 0, %s6, %s4
  $region1: #{tpu_custom_call.1} parent=0
    #allocation4 [shape = 'u8[2048]{0}', space=vmem, size = 0x800, scoped, tag = 'input window, operand 0, single buffered']
    #allocation5 [shape = 's32[1]{0}', space=sflag, size = 0x4, scoped, tag = 'scoped memory for tpu_custom_call.1']
    #allocation6 [shape = 's32[1]{0}', space=sflag, size = 0x4, scoped, tag = 'scoped memory for tpu_custom_call.1']
    #allocation7 [shape = 's32[1]{0}', space=sflag, size = 0x4, scoped, tag = 'scoped memory for tpu_custom_call.1']
    #allocation8 [shape = 'u8[512]{0}', space=vmem, size = 0x400, scoped, tag = 'input window, operand 1, single buffered']
    #allocation9 [shape = 's32[1]{0}', space=sflag, size = 0x4, scoped, tag = 'scoped memory for tpu_custom_call.1']
    #allocation10 [shape = 'u8[512]{0}', space=smem, size = 0x200, scoped, tag = 'input window, operand 2, single buffered']
    #allocation11 [shape = 'u8[512]{0}', space=vmem, size = 0x400, scoped, tag = 'output window, operand 0, single buffered']
    %8 = vsyncpa [#allocation5], 0
    %9 = vsyncpa [#allocation9], 0
    %10 = vsyncpa [#allocation7], 0
    %11 = vsyncpa [#allocation6], 0
    // Predicated region
    $region2: #{tpu_custom_call.1} parent=1 // pred_check
      _
    $region3: #{tpu_custom_call.1} parent=1 // pred_check_branch
      %13 = sbr.rel (0) target = $region5
    $region4: #{tpu_custom_call.1} parent=1 // pred_region
      %15 = vsyncadd [#allocation5], 0
      %s17 = sshll.u32 %s0, 4
      %s18 = int_to_ptr.hbm [resolvable:$true] %s17
      %s19 = sshll.u32 [#allocation4], 4
      %s20 = int_to_ptr.vmem [resolvable:$true] %s19
      %22 = dma.hbm_to_vmem [thread:$0]  %s18, 64, %s20, [#allocation5]
    $region5: #{tpu_custom_call.1} parent=1 // pred_fallthru
      _
    // Predicated region
    $region6: #{tpu_custom_call.1} parent=1 // pred_check
      _
    $region7: #{tpu_custom_call.1} parent=1 // pred_check_branch
      %24 = sbr.rel (0) target = $region9
    $region8: #{tpu_custom_call.1} parent=1 // pred_region
      %26 = vsyncadd [#allocation9], 0
      %s28 = sshll.u32 %s1, 4
      %s29 = int_to_ptr.hbm [resolvable:$true] %s28
      %s30 = sshll.u32 [#allocation8], 4
      %s31 = int_to_ptr.vmem [resolvable:$true] %s30
      %33 = dma.hbm_to_vmem [thread:$0]  %s29, 16, %s31, [#allocation9]
    $region9: #{tpu_custom_call.1} parent=1 // pred_fallthru
      _
    // Predicated region
    $region10: #{tpu_custom_call.1} parent=1 // pred_check
      _
    $region11: #{tpu_custom_call.1} parent=1 // pred_check_branch
      %35 = sbr.rel (0) target = $region13
    $region12: #{tpu_custom_call.1} parent=1 // pred_region
      %37 = vsyncadd [#allocation7], 0
      %s39 = sshll.u32 %s2, 4
      %s40 = int_to_ptr.vmem [resolvable:$true] %s39
      %42 = dma.vmem_to_smem %s40, 16, [#allocation10], [#allocation7]
    $region13: #{tpu_custom_call.1} parent=1 // pred_fallthru
      _
    // Predicated region
    $region14: #{tpu_custom_call.1} parent=1 // pred_check
      _
    $region15: #{tpu_custom_call.1} parent=1 // pred_check_branch
      %44 = sbr.rel (0) target = $region17
    $region16: #{tpu_custom_call.1} parent=1 // pred_region
      %46 = dma.done [#allocation5], 64
    $region17: #{tpu_custom_call.1} parent=1 // pred_fallthru
      _
    // Predicated region
    $region18: #{tpu_custom_call.1} parent=1 // pred_check
      _
    $region19: #{tpu_custom_call.1} parent=1 // pred_check_branch
      %48 = sbr.rel (0) target = $region21
    $region20: #{tpu_custom_call.1} parent=1 // pred_region
      %50 = dma.done [#allocation9], 16
    $region21: #{tpu_custom_call.1} parent=1 // pred_fallthru
      _
    // Predicated region
    $region22: #{tpu_custom_call.1} parent=1 // pred_check
      _
    $region23: #{tpu_custom_call.1} parent=1 // pred_check_branch
      %52 = sbr.rel (0) target = $region25
    $region24: #{tpu_custom_call.1} parent=1 // pred_region
      %54 = dma.done [#allocation7], 16
    $region25: #{tpu_custom_call.1} parent=1 // pred_fallthru
      _
    %55 = sfence
    %p56 = scmp.eq.s32.totalorder 0, 0
    // Predicated region
    $region26: #{tpu_custom_call.1} parent=1 // pred_check
      %p57 = pneg %p56
    $region27: #{tpu_custom_call.1} parent=1 // pred_check_branch
      %59 = sbr.rel (%p57) target = $region29
    $region28: #{tpu_custom_call.1} parent=1 // pred_region
      %vm60 = vcmask 0
      %61 = vst.msk [vmem:[#allocation2] sm:$0x1] %vm60, 0.0
      %62 = vst.msk [vmem:[#allocation3] sm:$0x1] %vm60, 0.0
    $region29: #{tpu_custom_call.1} parent=1 // pred_fallthru
      _
    %v63 = vld [vmem:[#allocation4] sm:$0x7]
    %v64 = vld [vmem:[#allocation8] sm:$0x1]
    %v66 = vrot.slane %v63, 1
    %v68 = vmax.f32 %v63, %v66
    %v69 = vrot.slane %v63, 2
    %v71 = vmax.f32 %v68, %v69
    %v72 = vsub.f32 %v63, %v71
    %v73 = vmul.f32 %v72, 1.442695
    %v74 = vpow.pop %v73
    %v76 = vrot.slane %v71, 7
    %v78 = vsub.f32 %v63, %v76
    %v79 = vmul.f32 %v78, 1.442695
    %v80 = vpow.pop %v79
    %v82 = vrot.slane %v80, 1
    %v84 = vadd.f32 %v74, %v82
    %v85 = vrot.slane %v71, 6
    %v87 = vsub.f32 %v63, %v85
    %v88 = vmul.f32 %v87, 1.442695
    %v89 = vpow.pop %v88
    %v91 = vrot.slane %v89, 2
    %v93 = vadd.f32 %v84, %v91
    %v94 = vlog2.pop %v93
    %v95 = vmul.f32 %v94, 0.6931472
    %vm96 = vcmp.eq.s32.totalorder %v64, 0
    %vm97 = vcmp.eq.s32.totalorder %v64, 1
    %98 = vst [vmem:[#allocation1] sm:$0xff] %v63
    %s99 = scalar_lea.vmem [#allocation1], 1
    %v100 = vld [vmem:[%s99] ss:$9 sm:$0xff]
    %102 = vst [vmem:[#allocation1] sm:$0xff] %v63
    %s103 = scalar_lea.vmem [#allocation1], 2
    %v104 = vld [vmem:[%s103] ss:$9 sm:$0xff]
    %v106 = vsel %vm97, %v100, %v104
    %v107 = vsel %vm96, %v63, %v106
    %v108 = vadd.f32 %v95, %v71
    %v109 = vsub.f32 %v108, %v107
    %s110 = sld [smem:[#allocation10]]
    %s111 = sld [smem:[#allocation10 + $0x1]]
    %s112 = sld [smem:[#allocation10 + $0x2]]
    %v113 = vstv %s111
    %v114 = vstv %s112
    %v115 = vsel %vm97, %v113, %v114
    %v116 = vstv %s110
    %v117 = vsel %vm96, %v116, %v115
    %v118 = vlaneseq
    %v119 = vand.u32 %v118, 127
    %s120 = smul.u32 0, 128
    %v121 = vstv %s120
    %v122 = vadd.s32 %v121, %v119
    %vm123 = vcmp.lt.s32.totalorder %v122, 8
    %v124 = vsel %vm123, %v109, 0.0
    %v125 = vsel %vm123, %v117, 0.0
    %v126 = vld [vmem:[#allocation2] sm:$0x1]
    %vm127 = vcmask 1040384
    %v128 = vsel %vm127, %v124, 0.0
    %129 = vadd.xlane.f32.xlu0 %v128
    %v130 = vpop.xlane.xlu0 %129
    %v131 = vadd.f32 %v126, %v130
    %vm132 = vcmask 0
    %133 = vst.msk [vmem:[#allocation2] sm:$0x1] %vm132, %v131
    %v134 = vld [vmem:[#allocation3] sm:$0x1]
    %v135 = vsel %vm127, %v125, 0.0
    %136 = vadd.xlane.f32.xlu0 %v135
    %v137 = vpop.xlane.xlu0 %136
    %v138 = vadd.f32 %v134, %v137
    %139 = vst.msk [vmem:[#allocation3] sm:$0x1] %vm132, %v138
    // Predicated region
    $region30: #{tpu_custom_call.1} parent=1 // pred_check
      %p140 = pneg %p56
    $region31: #{tpu_custom_call.1} parent=1 // pred_check_branch
      %142 = sbr.rel (%p140) target = $region33
    $region32: #{tpu_custom_call.1} parent=1 // pred_region
      %v143 = vld [vmem:[#allocation2] sm:$0x1]
      %v144 = vmul.f32 %v143, 0.125
      %v145 = vld [vmem:[#allocation3] sm:$0x1]
      %v146 = vmul.f32 %v145, 0.125
      %v147 = vmul.f32 %v146, %v144
      %148 = vst.msk [vmem:[#allocation11] sm:$0x1] %vm132, %v147
    $region33: #{tpu_custom_call.1} parent=1 // pred_fallthru
      _
    // Predicated region
    $region34: #{tpu_custom_call.1} parent=1 // pred_check
      _
    $region35: #{tpu_custom_call.1} parent=1 // pred_check_branch
      %150 = sbr.rel (0) target = $region37
    $region36: #{tpu_custom_call.1} parent=1 // pred_region
      %152 = vsyncadd [#allocation6], 0
      %s154 = sshll.u32 [#allocation11], 4
      %s155 = int_to_ptr.vmem [resolvable:$true] %s154
      %s156 = sshll.u32 %s3, 4
      %s157 = int_to_ptr.hbm [resolvable:$true] %s156
      %159 = dma.vmem_to_hbm [thread:$0]  %s155, 16, %s157, [#allocation6]
    $region37: #{tpu_custom_call.1} parent=1 // pred_fallthru
      _
    // Predicated region
    $region38: #{tpu_custom_call.1} parent=1 // pred_check
      _
    $region39: #{tpu_custom_call.1} parent=1 // pred_check_branch
      %161 = sbr.rel (0) target = $region41
    $region40: #{tpu_custom_call.1} parent=1 // pred_region
      %163 = dma.done [#allocation6], 16
    $region41: #{tpu_custom_call.1} parent=1 // pred_fallthru
      _
    %164 = vsyncpa [#allocation5], 1
    %165 = vsyncpa [#allocation9], 1
    %166 = vsyncpa [#allocation6], 1
    %167 = vsyncpa [#allocation7], 1

</llo_original>
